<compile_context>
chip_gen: v5e
topology: v5e:2x2
jax: 0.10.0
libtpu: 0.0.40
codegen_flags: <defaults>
</compile_context>

<pallas_src>
import functools

import jax
import jax.numpy as jnp
from jax.experimental import pallas as pl
from jax.experimental.pallas import tpu as pltpu

LANE = 128


def _round_up(n, m):
    return ((n + m - 1) // m) * m


# ---------------------------------------------------------------------------
# Fused encoder + decoder kernel (single invocation, everything VMEM-resident)
# ---------------------------------------------------------------------------
def _fused_kernel(x_ref, len_ref, w_enc_ref, b_enc_ref, w1_ref, b1_ref,
                  w2_ref, b2_ref, xhat_ref, z_ref):
    x = x_ref[...]                                   # [B, T, E]  f32
    lens = jnp.maximum(len_ref[...], 1)              # [B, 1]     i32 (guard /0)
    B, T, _ = x.shape

    # mask[b, t] = 1/len[b] if t < len[b] else 0   (reciprocal on the EUP)
    t_idx = jax.lax.broadcasted_iota(jnp.int32, (B, T), 1)
    inv_len = pl.reciprocal(lens.astype(jnp.float32), approx=False)    # [B, 1]
    mask = (t_idx < lens).astype(jnp.float32) * inv_len                # [B, T]

    # masked mean pool over T (f32)
    pooled = jnp.sum(x * mask[:, :, None], axis=1)                     # [B, E]

    # encoder: Linear(E -> Hp) + ReLU   (bf16 MXU, f32 accumulate)
    z = jnp.dot(pooled.astype(jnp.bfloat16), w_enc_ref[...],
                preferred_element_type=jnp.float32) + b_enc_ref[...]
    z = jnp.maximum(z, 0.0)                                            # [B, Hp]
    z_ref[...] = z

    # decoder layer 1: Linear(Hp -> H2p) + ReLU
    h = jnp.dot(z.astype(jnp.bfloat16), w1_ref[...],
                preferred_element_type=jnp.float32) + b1_ref[...]
    h = jnp.maximum(h, 0.0)                                            # [B, H2p]

    # decoder layer 2: Linear(H2p -> OUTp) + Sigmoid
    logits = jnp.dot(h.astype(jnp.bfloat16), w2_ref[...],
                     preferred_element_type=jnp.float32) + b2_ref[...]
    xhat_ref[...] = jax.nn.sigmoid(logits)                             # [B, OUTp]


# ---------------------------------------------------------------------------
# Parameter init (f32) + one-time padding / bf16 cast for the kernel
# ---------------------------------------------------------------------------
def init_params(key, emb_dim, h_dim, out_dim=784):
    ks = jax.random.split(key, 4)
    scale = 0.05
    return {
        "w_enc": scale * jax.random.normal(ks[0], (emb_dim, h_dim), jnp.float32),
        "b_enc": jnp.zeros((1, h_dim), jnp.float32),
        "w1": scale * jax.random.normal(ks[1], (h_dim, 2 * h_dim), jnp.float32),
        "b1": jnp.zeros((1, 2 * h_dim), jnp.float32),
        "w2": scale * jax.random.normal(ks[2], (2 * h_dim, out_dim), jnp.float32),
        "b2": jnp.zeros((1, out_dim), jnp.float32),
    }


def _pad2(a, rows, cols, dtype):
    r, c = a.shape
    return jnp.pad(a, ((0, rows - r), (0, cols - c))).astype(dtype)


def prepare_params(params):
    """Zero-pad to lane-dense widths; weights -> bf16, biases stay f32."""
    E, H = params["w_enc"].shape
    H2 = params["w1"].shape[1]
    OUT = params["w2"].shape[1]
    Hp = _round_up(H, LANE)
    H2p = _round_up(H2, LANE)
    OUTp = _round_up(OUT, LANE)
    return {
        "w_enc": _pad2(params["w_enc"], E, Hp, jnp.bfloat16),
        "b_enc": _pad2(params["b_enc"], 1, Hp, jnp.float32),
        "w1": _pad2(params["w1"], Hp, H2p, jnp.bfloat16),
        "b1": _pad2(params["b1"], 1, H2p, jnp.float32),
        "w2": _pad2(params["w2"], H2p, OUTp, jnp.bfloat16),
        "b2": _pad2(params["b2"], 1, OUTp, jnp.float32),
    }


# ---------------------------------------------------------------------------
# Forward wrapper: one fused pallas_call, slice padding off outside
# ---------------------------------------------------------------------------
@functools.partial(jax.jit, static_argnames=("h_dim", "out_dim"))
def simple_seq2seq_forward(x, x_len, padded_params, *, h_dim, out_dim=784):
    """Training-path forward: returns (x_, preds=None, z) like the PyTorch module."""
    B, T, E = x.shape
    Hp = padded_params["w_enc"].shape[1]
    H2p = padded_params["w1"].shape[1]
    OUTp = padded_params["w2"].shape[1]

    def full(shape):
        n = len(shape)
        return pl.BlockSpec(shape, lambda i, n=n: (0,) * n)

    x_pad, z_pad = pl.pallas_call(
        _fused_kernel,
        out_shape=(
            jax.ShapeDtypeStruct((B, OUTp), jnp.float32),   # x_ (padded)
            jax.ShapeDtypeStruct((B, Hp), jnp.float32),     # z  (padded)
        ),
        grid=(1,),
        in_specs=[
            full((B, T, E)),          # x
            full((B, 1)),             # x_len
            full((E, Hp)),            # w_enc (bf16)
            full((1, Hp)),            # b_enc
            full((Hp, H2p)),          # w1 (bf16)
            full((1, H2p)),           # b1
            full((H2p, OUTp)),        # w2 (bf16)
            full((1, OUTp)),          # b2
        ],
        out_specs=(
            full((B, OUTp)),          # x_
            full((B, Hp)),            # z
        ),
        compiler_params=pltpu.CompilerParams(
            dimension_semantics=("arbitrary",)),
    )(x, x_len,
      padded_params["w_enc"], padded_params["b_enc"],
      padded_params["w1"], padded_params["b1"],
      padded_params["w2"], padded_params["b2"])

    x_ = x_pad[:, :out_dim]
    z = z_pad[:, :h_dim]
    preds = None  # TODO(synk): token-level preds come from the external decoder
    return x_, preds, z


# ---------------------------------------------------------------------------
# Pure-JAX f32 reference for correctness check
# ---------------------------------------------------------------------------
def _reference_forward(x, x_len, params):
    B, T, E = x.shape
    mask = (jnp.arange(T)[None, :] < x_len).astype(jnp.float32)       # [B, T]
    pooled = jnp.sum(x * mask[:, :, None], axis=1) / x_len.astype(jnp.float32)
    z = jnp.maximum(pooled @ params["w_enc"] + params["b_enc"], 0.0)
    h = jnp.maximum(z @ params["w1"] + params["b1"], 0.0)
    x_ = jax.nn.sigmoid(h @ params["w2"] + params["b2"])
    return x_, z


if __name__ == "__main__":
    B, T, E, H = 8, 16, 32, 32   # batch, seq len, embedding dim, h_dim
    OUT = 784

    key = jax.random.PRNGKey(0)
    k_x, k_len, k_p = jax.random.split(key, 3)

    x = jax.random.normal(k_x, (B, T, E), jnp.float32)
    x_len = jax.random.randint(k_len, (B, 1), 1, T + 1, jnp.int32)   # lengths in [1, T]
    params = init_params(k_p, E, H, OUT)
    padded = prepare_params(params)                                  # one-time pad + bf16

    x_, preds, z = simple_seq2seq_forward(x, x_len, padded, h_dim=H, out_dim=OUT)
    jax.block_until_ready(x_)
    jax.block_until_ready(z)

    # sanity check vs pure-JAX f32 reference (kernel matmuls run in bf16)
    x_ref, z_ref = _reference_forward(x, x_len, params)
    assert x_.shape == (B, OUT) and z.shape == (B, H)
    assert jnp.allclose(x_, x_ref, atol=2e-2), float(jnp.max(jnp.abs(x_ - x_ref)))
    assert jnp.allclose(z, z_ref, atol=2e-2), float(jnp.max(jnp.abs(z - z_ref)))

    print("KERNEL_OK")
</pallas_src>

<mosaic_0001>
module attributes {stable_mosaic.version = 11 : i64} {
  func.func @_fused_kernel(%arg0: i32, %arg1: memref<8x16x32xf32, #tpu.memory_space<vmem>>, %arg2: memref<8x1xi32, #tpu.memory_space<vmem>>, %arg3: memref<32x128xbf16, #tpu.memory_space<vmem>>, %arg4: memref<1x128xf32, #tpu.memory_space<vmem>>, %arg5: memref<128x128xbf16, #tpu.memory_space<vmem>>, %arg6: memref<1x128xf32, #tpu.memory_space<vmem>>, %arg7: memref<128x896xbf16, #tpu.memory_space<vmem>>, %arg8: memref<1x896xf32, #tpu.memory_space<vmem>>, %arg9: memref<8x896xf32, #tpu.memory_space<vmem>>, %arg10: memref<8x128xf32, #tpu.memory_space<vmem>>) attributes {dimension_semantics = [#tpu.dimension_semantics<arbitrary>], iteration_bounds = array<i64: 1>, scalar_prefetch = 0 : i64, scratch_operands = 0 : i64, tpu.core_type = #tpu.core_type<tc>, window_params = [{pipeline_mode = #tpu.pipeline_mode<synchronous>, transform_indices = @transform_0, window_bounds = array<i64: 8, 16, 32>}, {pipeline_mode = #tpu.pipeline_mode<synchronous>, transform_indices = @transform_1, window_bounds = array<i64: 8, 1>}, {pipeline_mode = #tpu.pipeline_mode<synchronous>, transform_indices = @transform_2, window_bounds = array<i64: 32, 128>}, {pipeline_mode = #tpu.pipeline_mode<synchronous>, transform_indices = @transform_3, window_bounds = array<i64: 1, 128>}, {pipeline_mode = #tpu.pipeline_mode<synchronous>, transform_indices = @transform_4, window_bounds = array<i64: 128, 128>}, {pipeline_mode = #tpu.pipeline_mode<synchronous>, transform_indices = @transform_5, window_bounds = array<i64: 1, 128>}, {pipeline_mode = #tpu.pipeline_mode<synchronous>, transform_indices = @transform_6, window_bounds = array<i64: 128, 896>}, {pipeline_mode = #tpu.pipeline_mode<synchronous>, transform_indices = @transform_7, window_bounds = array<i64: 1, 896>}, {pipeline_mode = #tpu.pipeline_mode<synchronous>, transform_indices = @transform_8, window_bounds = array<i64: 8, 896>}, {pipeline_mode = #tpu.pipeline_mode<synchronous>, transform_indices = @transform_9, window_bounds = array<i64: 8, 128>}]} {
    %c0 = arith.constant 0 : index
    %c0_0 = arith.constant 0 : index
    %c0_1 = arith.constant 0 : index
    %0 = vector.load %arg1[%c0, %c0_0, %c0_1] : memref<8x16x32xf32, #tpu.memory_space<vmem>>, vector<8x16x32xf32>
    %c0_2 = arith.constant 0 : index
    %c0_3 = arith.constant 0 : index
    %1 = vector.load %arg2[%c0_2, %c0_3] : memref<8x1xi32, #tpu.memory_space<vmem>>, vector<8x1xi32>
    %c1_i32 = arith.constant 1 : i32
    %2 = vector.broadcast %c1_i32 : i32 to vector<8x1xi32>
    %3 = arith.maxsi %1, %2 : vector<8x1xi32>
    %4 = tpu.iota {dimensions = array<i32: 1>} : vector<8x16xi32>
    %5 = arith.sitofp %3 : vector<8x1xi32> to vector<8x1xf32>
    %6 = tpu.reciprocal %5 : vector<8x1xf32> -> vector<8x1xf32>
    %7 = vector.broadcast %3 : vector<8x1xi32> to vector<8x16xi32>
    %8 = arith.cmpi slt, %4, %7 : vector<8x16xi32>
    %9 = arith.extui %8 : vector<8x16xi1> to vector<8x16xi32>
    %10 = arith.sitofp %9 : vector<8x16xi32> to vector<8x16xf32>
    %11 = vector.broadcast %6 : vector<8x1xf32> to vector<8x16xf32>
    %12 = arith.mulf %10, %11 : vector<8x16xf32>
    %13 = vector.shape_cast %12 : vector<8x16xf32> to vector<8x16x1xf32>
    %14 = vector.broadcast %13 : vector<8x16x1xf32> to vector<8x16x32xf32>
    %15 = arith.mulf %0, %14 : vector<8x16x32xf32>
    %cst = arith.constant dense<0.000000e+00> : vector<8x32xf32>
    %16 = vector.multi_reduction <add>, %15, %cst [1] : vector<8x16x32xf32> to vector<8x32xf32>
    %17 = arith.truncf %16 : vector<8x32xf32> to vector<8x32xbf16>
    %c0_4 = arith.constant 0 : index
    %c0_5 = arith.constant 0 : index
    %18 = vector.load %arg3[%c0_4, %c0_5] : memref<32x128xbf16, #tpu.memory_space<vmem>>, vector<32x128xbf16>
    %cst_6 = arith.constant dense<0.000000e+00> : vector<8x128xf32>
    %19 = tpu.matmul %17, %18, %cst_6 {dimension_numbers = #tpu.dot_dimension_numbers<[1], [0], [0], [1], [0, 0, 1, 1], [], []>} : vector<8x32xbf16>, vector<32x128xbf16>, vector<8x128xf32> -> vector<8x128xf32>
    %c0_7 = arith.constant 0 : index
    %c0_8 = arith.constant 0 : index
    %20 = vector.load %arg4[%c0_7, %c0_8] : memref<1x128xf32, #tpu.memory_space<vmem>>, vector<1x128xf32>
    %21 = vector.broadcast %20 : vector<1x128xf32> to vector<8x128xf32>
    %22 = arith.addf %19, %21 : vector<8x128xf32>
    %cst_9 = arith.constant 0.000000e+00 : f32
    %23 = vector.broadcast %cst_9 : f32 to vector<8x128xf32>
    %24 = arith.maximumf %22, %23 : vector<8x128xf32>
    %c0_10 = arith.constant 0 : index
    %c0_11 = arith.constant 0 : index
    %25 = vector.load %arg10[%c0_10, %c0_11] : memref<8x128xf32, #tpu.memory_space<vmem>>, vector<8x128xf32>
    tpu.vector_store %arg10[%c0_10, %c0_11], %24 {strides = array<i32>} : memref<8x128xf32, #tpu.memory_space<vmem>>, vector<8x128xf32>,
    %26 = arith.truncf %24 : vector<8x128xf32> to vector<8x128xbf16>
    %c0_12 = arith.constant 0 : index
    %c0_13 = arith.constant 0 : index
    %27 = vector.load %arg5[%c0_12, %c0_13] : memref<128x128xbf16, #tpu.memory_space<vmem>>, vector<128x128xbf16>
    %cst_14 = arith.constant dense<0.000000e+00> : vector<8x128xf32>
    %28 = tpu.matmul %26, %27, %cst_14 {dimension_numbers = #tpu.dot_dimension_numbers<[1], [0], [0], [1], [0, 0, 1, 1], [], []>} : vector<8x128xbf16>, vector<128x128xbf16>, vector<8x128xf32> -> vector<8x128xf32>
    %c0_15 = arith.constant 0 : index
    %c0_16 = arith.constant 0 : index
    %29 = vector.load %arg6[%c0_15, %c0_16] : memref<1x128xf32, #tpu.memory_space<vmem>>, vector<1x128xf32>
    %30 = vector.broadcast %29 : vector<1x128xf32> to vector<8x128xf32>
    %31 = arith.addf %28, %30 : vector<8x128xf32>
    %cst_17 = arith.constant 0.000000e+00 : f32
    %32 = vector.broadcast %cst_17 : f32 to vector<8x128xf32>
    %33 = arith.maximumf %31, %32 : vector<8x128xf32>
    %34 = arith.truncf %33 : vector<8x128xf32> to vector<8x128xbf16>
    %c0_18 = arith.constant 0 : index
    %c0_19 = arith.constant 0 : index
    %35 = vector.load %arg7[%c0_18, %c0_19] : memref<128x896xbf16, #tpu.memory_space<vmem>>, vector<128x896xbf16>
    %cst_20 = arith.constant dense<0.000000e+00> : vector<8x896xf32>
    %36 = tpu.matmul %34, %35, %cst_20 {dimension_numbers = #tpu.dot_dimension_numbers<[1], [0], [0], [1], [0, 0, 1, 1], [], []>} : vector<8x128xbf16>, vector<128x896xbf16>, vector<8x896xf32> -> vector<8x896xf32>
    %c0_21 = arith.constant 0 : index
    %c0_22 = arith.constant 0 : index
    %37 = vector.load %arg8[%c0_21, %c0_22] : memref<1x896xf32, #tpu.memory_space<vmem>>, vector<1x896xf32>
    %38 = vector.broadcast %37 : vector<1x896xf32> to vector<8x896xf32>
    %39 = arith.addf %36, %38 : vector<8x896xf32>
    %40 = arith.negf %39 : vector<8x896xf32>
    %41 = math.exp %40 : vector<8x896xf32>
    %cst_23 = arith.constant 1.000000e+00 : f32
    %42 = vector.broadcast %cst_23 : f32 to vector<8x896xf32>
    %43 = arith.addf %42, %41 : vector<8x896xf32>
    %44 = arith.divf %42, %43 : vector<8x896xf32>
    %c0_24 = arith.constant 0 : index
    %c0_25 = arith.constant 0 : index
    %45 = vector.load %arg9[%c0_24, %c0_25] : memref<8x896xf32, #tpu.memory_space<vmem>>, vector<8x896xf32>
    tpu.vector_store %arg9[%c0_24, %c0_25], %44 {strides = array<i32>} : memref<8x896xf32, #tpu.memory_space<vmem>>, vector<8x896xf32>,
    return
  }
  func.func @transform_0(%arg0: i32) -> (i32, i32, i32) {
    %c0_i32 = arith.constant 0 : i32
    %c0_i32_0 = arith.constant 0 : i32
    %c0_i32_1 = arith.constant 0 : i32
    %c0_i32_2 = arith.constant 0 : i32
    return %c0_i32, %c0_i32_0, %c0_i32_1 : i32, i32, i32
  }
  func.func @transform_1(%arg0: i32) -> (i32, i32) {
    %c0_i32 = arith.constant 0 : i32
    %c0_i32_0 = arith.constant 0 : i32
    %c0_i32_1 = arith.constant 0 : i32
    return %c0_i32, %c0_i32_0 : i32, i32
  }
  func.func @transform_2(%arg0: i32) -> (i32, i32) {
    %c0_i32 = arith.constant 0 : i32
    %c0_i32_0 = arith.constant 0 : i32
    %c0_i32_1 = arith.constant 0 : i32
    return %c0_i32, %c0_i32_0 : i32, i32
  }
  func.func @transform_3(%arg0: i32) -> (i32, i32) {
    %c0_i32 = arith.constant 0 : i32
    %c0_i32_0 = arith.constant 0 : i32
    %c0_i32_1 = arith.constant 0 : i32
    return %c0_i32, %c0_i32_0 : i32, i32
  }
  func.func @transform_4(%arg0: i32) -> (i32, i32) {
    %c0_i32 = arith.constant 0 : i32
    %c0_i32_0 = arith.constant 0 : i32
    %c0_i32_1 = arith.constant 0 : i32
    return %c0_i32, %c0_i32_0 : i32, i32
  }
  func.func @transform_5(%arg0: i32) -> (i32, i32) {
    %c0_i32 = arith.constant 0 : i32
    %c0_i32_0 = arith.constant 0 : i32
    %c0_i32_1 = arith.constant 0 : i32
    return %c0_i32, %c0_i32_0 : i32, i32
  }
  func.func @transform_6(%arg0: i32) -> (i32, i32) {
    %c0_i32 = arith.constant 0 : i32
    %c0_i32_0 = arith.constant 0 : i32
    %c0_i32_1 = arith.constant 0 : i32
    return %c0_i32, %c0_i32_0 : i32, i32
  }
  func.func @transform_7(%arg0: i32) -> (i32, i32) {
    %c0_i32 = arith.constant 0 : i32
    %c0_i32_0 = arith.constant 0 : i32
    %c0_i32_1 = arith.constant 0 : i32
    return %c0_i32, %c0_i32_0 : i32, i32
  }
  func.func @transform_8(%arg0: i32) -> (i32, i32) {
    %c0_i32 = arith.constant 0 : i32
    %c0_i32_0 = arith.constant 0 : i32
    %c0_i32_1 = arith.constant 0 : i32
    return %c0_i32, %c0_i32_0 : i32, i32
  }
  func.func @transform_9(%arg0: i32) -> (i32, i32) {
    %c0_i32 = arith.constant 0 : i32
    %c0_i32_0 = arith.constant 0 : i32
    %c0_i32_1 = arith.constant 0 : i32
    return %c0_i32, %c0_i32_0 : i32, i32
  }
}

</mosaic_0001>

<llo_original>
// kernel: simple_seq2seq_forward.1
$region0: #{simple_seq2seq_forward.1}
  #allocation0 [shape = 'u32[]', space=smem, size = 0x4, offset = 0x4, fixed_abs, tag = 'smem constant byte address 0x4 - core index']
  #allocation1 [shape = 'u32[72,128]{1,0:T(1,128)}', space=vmem, size = 0x9000, scoped, tag = 'internal scratch']
  %s0 = inlined_call_operand.hbm [shape: f32[8,16,32], index: 0, kind: input, shape index: {}]
  %s1 = inlined_call_operand.vmem [shape: s32[8,1], index: 1, kind: input, shape index: {}]
  %s2 = inlined_call_operand.hbm [shape: bf16[32,128], index: 2, kind: input, shape index: {}]
  %s3 = inlined_call_operand.vmem [shape: f32[1,128], index: 3, kind: input, shape index: {}]
  %s4 = inlined_call_operand.hbm [shape: bf16[128,128], index: 4, kind: input, shape index: {}]
  %s5 = inlined_call_operand.vmem [shape: f32[1,128], index: 5, kind: input, shape index: {}]
  %s6 = inlined_call_operand.hbm [shape: bf16[128,896], index: 6, kind: input, shape index: {}]
  %s7 = inlined_call_operand.vmem [shape: f32[1,896], index: 7, kind: input, shape index: {}]
  %s8 = inlined_call_operand.hbm [shape: f32[8,896], index: 8, kind: output, shape index: {0}]
  %s9 = inlined_call_operand.hbm [shape: f32[8,128], index: 9, kind: output, shape index: {1}]
  %10 = xla_tuple %s8, %s9
  %s11 = sld [smem:[#allocation0]]
  $region66: #{simple_seq2seq_forward.1} parent=0
    _
  %s13 = ssub.s32 1, %s11
  %s14 = scalar_select 0, %s13, %s11
  $region1: #{simple_seq2seq_forward.1} parent=0
    #allocation2 [shape = 'u8[65536]{0}', space=vmem, size = 0x10000, scoped, tag = 'input window, operand 0, single buffered']
    #allocation3 [shape = 's32[1]{0}', space=sflag, size = 0x4, scoped, tag = 'scoped memory for simple_seq2seq_forward.1']
    #allocation4 [shape = 's32[1]{0}', space=sflag, size = 0x4, scoped, tag = 'scoped memory for simple_seq2seq_forward.1']
    #allocation5 [shape = 'u8[8192]{0}', space=vmem, size = 0x2000, scoped, tag = 'input window, operand 2, single buffered']
    #allocation6 [shape = 's32[1]{0}', space=sflag, size = 0x4, scoped, tag = 'scoped memory for simple_seq2seq_forward.1']
    #allocation7 [shape = 'u8[32768]{0}', space=vmem, size = 0x8000, scoped, tag = 'input window, operand 4, single buffered']
    #allocation8 [shape = 'u8[229376]{0}', space=vmem, size = 0x38000, scoped, tag = 'input window, operand 6, single buffered']
    #allocation9 [shape = 's32[1]{0}', space=sflag, size = 0x4, scoped, tag = 'scoped memory for simple_seq2seq_forward.1']
    #allocation10 [shape = 'u8[28672]{0}', space=vmem, size = 0x7000, scoped, tag = 'output window, operand 0, single buffered']
    #allocation11 [shape = 'u8[4096]{0}', space=vmem, size = 0x1000, scoped, tag = 'output window, operand 1, single buffered']
    #allocation12 [shape = 's32[1]{0}', space=sflag, size = 0x4, scoped, tag = 'scoped memory for simple_seq2seq_forward.1']
    %15 = vsyncpa [#allocation3], 0
    %16 = vsyncpa [#allocation6], 0
    %17 = vsyncpa [#allocation9], 0
    %18 = vsyncpa [#allocation4], 0
    %19 = vsyncpa [#allocation12], 0
    // Predicated region
    $region2: #{simple_seq2seq_forward.1} parent=1 // pred_check
      _
    $region3: #{simple_seq2seq_forward.1} parent=1 // pred_check_branch
      %21 = sbr.rel (0) target = $region5
    $region4: #{simple_seq2seq_forward.1} parent=1 // pred_region
      %23 = vsyncadd [#allocation3], 0
      %s24 = sshll.u32 %s0, 4
      %s25 = int_to_ptr.hbm [resolvable:$true] %s24
      %s26 = sshll.u32 [#allocation2], 4
      %s27 = int_to_ptr.vmem [resolvable:$true] %s26
      %32 = dma.hbm_to_vmem [thread:$0]  %s25, 2048, %s27, [#allocation3], 128, 128, 8
    $region5: #{simple_seq2seq_forward.1} parent=1 // pred_fallthru
      _
    // Predicated region
    $region6: #{simple_seq2seq_forward.1} parent=1 // pred_check
      _
    $region7: #{simple_seq2seq_forward.1} parent=1 // pred_check_branch
      %34 = sbr.rel (0) target = $region9
    $region8: #{simple_seq2seq_forward.1} parent=1 // pred_region
      _
    $region9: #{simple_seq2seq_forward.1} parent=1 // pred_fallthru
      _
    // Predicated region
    $region10: #{simple_seq2seq_forward.1} parent=1 // pred_check
      _
    $region11: #{simple_seq2seq_forward.1} parent=1 // pred_check_branch
      %36 = sbr.rel (0) target = $region13
    $region12: #{simple_seq2seq_forward.1} parent=1 // pred_region
      %38 = vsyncadd [#allocation6], 0
      %s39 = sshll.u32 %s2, 4
      %s40 = int_to_ptr.hbm [resolvable:$true] %s39
      %s41 = sshll.u32 [#allocation5], 4
      %s42 = int_to_ptr.vmem [resolvable:$true] %s41
      %47 = dma.hbm_to_vmem [thread:$0]  %s40, 256, %s42, [#allocation6], 64, 64, 4
    $region13: #{simple_seq2seq_forward.1} parent=1 // pred_fallthru
      _
    // Predicated region
    $region14: #{simple_seq2seq_forward.1} parent=1 // pred_check
      _
    $region15: #{simple_seq2seq_forward.1} parent=1 // pred_check_branch
      %49 = sbr.rel (0) target = $region17
    $region16: #{simple_seq2seq_forward.1} parent=1 // pred_region
      _
    $region17: #{simple_seq2seq_forward.1} parent=1 // pred_fallthru
      _
    // Predicated region
    $region18: #{simple_seq2seq_forward.1} parent=1 // pred_check
      _
    $region19: #{simple_seq2seq_forward.1} parent=1 // pred_check_branch
      %51 = sbr.rel (0) target = $region21
    $region20: #{simple_seq2seq_forward.1} parent=1 // pred_region
      %53 = vsyncadd [#allocation6], 0
      %s54 = sshll.u32 %s4, 4
      %s55 = int_to_ptr.hbm [resolvable:$true] %s54
      %s56 = sshll.u32 [#allocation7], 4
      %s57 = int_to_ptr.vmem [resolvable:$true] %s56
      %62 = dma.hbm_to_vmem [thread:$0]  %s55, 1024, %s57, [#allocation6], 64, 64, 4
    $region21: #{simple_seq2seq_forward.1} parent=1 // pred_fallthru
      _
    // Predicated region
    $region22: #{simple_seq2seq_forward.1} parent=1 // pred_check
      _
    $region23: #{simple_seq2seq_forward.1} parent=1 // pred_check_branch
      %64 = sbr.rel (0) target = $region25
    $region24: #{simple_seq2seq_forward.1} parent=1 // pred_region
      _
    $region25: #{simple_seq2seq_forward.1} parent=1 // pred_fallthru
      _
    // Predicated region
    $region26: #{simple_seq2seq_forward.1} parent=1 // pred_check
      _
    $region27: #{simple_seq2seq_forward.1} parent=1 // pred_check_branch
      %66 = sbr.rel (0) target = $region29
    $region28: #{simple_seq2seq_forward.1} parent=1 // pred_region
      %68 = vsyncadd [#allocation9], 0
      %s69 = sshll.u32 %s6, 4
      %s70 = int_to_ptr.hbm [resolvable:$true] %s69
      %s71 = sshll.u32 [#allocation8], 4
      %s72 = int_to_ptr.vmem [resolvable:$true] %s71
      %77 = dma.hbm_to_vmem [thread:$0]  %s70, 7168, %s72, [#allocation9], 448, 448, 28
    $region29: #{simple_seq2seq_forward.1} parent=1 // pred_fallthru
      _
    // Predicated region
    $region30: #{simple_seq2seq_forward.1} parent=1 // pred_check
      _
    $region31: #{simple_seq2seq_forward.1} parent=1 // pred_check_branch
      %79 = sbr.rel (0) target = $region33
    $region32: #{simple_seq2seq_forward.1} parent=1 // pred_region
      _
    $region33: #{simple_seq2seq_forward.1} parent=1 // pred_fallthru
      _
    // Predicated region
    $region34: #{simple_seq2seq_forward.1} parent=1 // pred_check
      _
    $region35: #{simple_seq2seq_forward.1} parent=1 // pred_check_branch
      %81 = sbr.rel (0) target = $region37
    $region36: #{simple_seq2seq_forward.1} parent=1 // pred_region
      %83 = dma.done [#allocation3], 2048
    $region37: #{simple_seq2seq_forward.1} parent=1 // pred_fallthru
      _
    // Predicated region
    $region38: #{simple_seq2seq_forward.1} parent=1 // pred_check
      _
    $region39: #{simple_seq2seq_forward.1} parent=1 // pred_check_branch
      %85 = sbr.rel (0) target = $region41
    $region40: #{simple_seq2seq_forward.1} parent=1 // pred_region
      %87 = dma.done [#allocation6], 256
    $region41: #{simple_seq2seq_forward.1} parent=1 // pred_fallthru
      _
    // Predicated region
    $region42: #{simple_seq2seq_forward.1} parent=1 // pred_check
      _
    $region43: #{simple_seq2seq_forward.1} parent=1 // pred_check_branch
      %89 = sbr.rel (0) target = $region45
    $region44: #{simple_seq2seq_forward.1} parent=1 // pred_region
      %91 = dma.done [#allocation6], 1024
    $region45: #{simple_seq2seq_forward.1} parent=1 // pred_fallthru
      _
    // Predicated region
    $region46: #{simple_seq2seq_forward.1} parent=1 // pred_check
      _
    $region47: #{simple_seq2seq_forward.1} parent=1 // pred_check_branch
      %93 = sbr.rel (0) target = $region49
    $region48: #{simple_seq2seq_forward.1} parent=1 // pred_region
      %95 = dma.done [#allocation9], 7168
    $region49: #{simple_seq2seq_forward.1} parent=1 // pred_fallthru
      _
    %v97 = vld [vmem:[#allocation2] sm:$0xff]
    %v98 = vld [vmem:[#allocation2 + $0x8] sm:$0xff]
    %v99 = vld [vmem:[#allocation2 + $0x10] sm:$0xff]
    %v100 = vld [vmem:[#allocation2 + $0x18] sm:$0xff]
    %v101 = vld [vmem:[#allocation2 + $0x20] sm:$0xff]
    %v102 = vld [vmem:[#allocation2 + $0x28] sm:$0xff]
    %v103 = vld [vmem:[#allocation2 + $0x30] sm:$0xff]
    %v104 = vld [vmem:[#allocation2 + $0x38] sm:$0xff]
    %v105 = vld [vmem:[#allocation2 + $0x40] sm:$0xff]
    %v106 = vld [vmem:[#allocation2 + $0x48] sm:$0xff]
    %v107 = vld [vmem:[#allocation2 + $0x50] sm:$0xff]
    %v108 = vld [vmem:[#allocation2 + $0x58] sm:$0xff]
    %v109 = vld [vmem:[#allocation2 + $0x60] sm:$0xff]
    %v110 = vld [vmem:[#allocation2 + $0x68] sm:$0xff]
    %v111 = vld [vmem:[#allocation2 + $0x70] sm:$0xff]
    %v112 = vld [vmem:[#allocation2 + $0x78] sm:$0xff]
    %v113 = vld [vmem:[%s1] sm:$0xff]
    %vm114 = vcmp.gt.s32.totalorder %v113, 1
    %v115 = vsel %vm114, %v113, 1
    %v116 = vlaneseq
    %v117 = vand.u32 %v116, 127
    %v118 = vcvt.s32.f32 %v115
    %v119 = vrcp.pop %v118
    %v120 = vmul.f32 %v118, %v119
    %v121 = vsub.f32 1.0, %v120
    %v122 = vmul.f32 %v119, %v121
    %v123 = vadd.f32 %v119, %v122
    %vm124 = vweird.f32 %v118
    %vm125 = vweird.f32 %v119
    %vm126 = vmor %vm124, %vm125
    %v127 = vsel %vm126, %v119, %v123
    %v128 = vand.u32 2147483647, %v118
    %vm129 = vcmp.eq.f32.partialorder %v128, 8.507059e+37
    %v130 = vand.u32 %v118, 2147483648
    %v131 = vor.u32 1.1754944e-38, %v130
    %v132 = vsel %vm129, %v131, %v127
    %133 = vset.pattern.permute.xlu0 0
    %134 = vperm.xlu0 %133, %v115
    %v135 = vpop.permute.xlu0 %134
    %vm136 = vcmp.lt.s32.totalorder %v117, %v135
    %v137 = vsel %vm136, 1, 0
    %v138 = vcvt.s32.f32 %v137
    %140 = vset.pattern.permute.xlu0 0
    %141 = vperm.xlu0 %140, %v132
    %v142 = vpop.permute.xlu0 %141
    %v144 = vmul.f32 %v138, %v142
    %v145 = vperm.slane %v144, 0
    %v146 = vlaneseq
    %v147 = vshrl.u32 %v146, 7
    %149 = vset.pattern.permute.xlu0 %v147
    %150 = vperm.xlu0 %149, %v145
    %v151 = vpop.permute.xlu0 %150
    %v152 = vlaneseq
    %v153 = vshrl.u32 %v152, 7
    %v154 = vadd.s32 %v153, 8
    %155 = vset.pattern.permute.xlu0 %v154
    %156 = vperm.xlu0 %155, %v145
    %v157 = vpop.permute.xlu0 %156
    %v158 = vperm.slane %v144, 1
    %v159 = vlaneseq
    %v160 = vshrl.u32 %v159, 7
    %162 = vset.pattern.permute.xlu0 %v160
    %163 = vperm.xlu0 %162, %v158
    %v164 = vpop.permute.xlu0 %163
    %v165 = vlaneseq
    %v166 = vshrl.u32 %v165, 7
    %v167 = vadd.s32 %v166, 8
    %168 = vset.pattern.permute.xlu0 %v167
    %169 = vperm.xlu0 %168, %v158
    %v170 = vpop.permute.xlu0 %169
    %v171 = vperm.slane %v144, 2
    %v172 = vlaneseq
    %v173 = vshrl.u32 %v172, 7
    %175 = vset.pattern.permute.xlu0 %v173
    %176 = vperm.xlu0 %175, %v171
    %v177 = vpop.permute.xlu0 %176
    %v178 = vlaneseq
    %v179 = vshrl.u32 %v178, 7
    %v180 = vadd.s32 %v179, 8
    %181 = vset.pattern.permute.xlu0 %v180
    %182 = vperm.xlu0 %181, %v171
    %v183 = vpop.permute.xlu0 %182
    %v184 = vperm.slane %v144, 3
    %v185 = vlaneseq
    %v186 = vshrl.u32 %v185, 7
    %188 = vset.pattern.permute.xlu0 %v186
    %189 = vperm.xlu0 %188, %v184
    %v190 = vpop.permute.xlu0 %189
    %v191 = vlaneseq
    %v192 = vshrl.u32 %v191, 7
    %v193 = vadd.s32 %v192, 8
    %194 = vset.pattern.permute.xlu0 %v193
    %195 = vperm.xlu0 %194, %v184
    %v196 = vpop.permute.xlu0 %195
    %v197 = vperm.slane %v144, 4
    %v198 = vlaneseq
    %v199 = vshrl.u32 %v198, 7
    %201 = vset.pattern.permute.xlu0 %v199
    %202 = vperm.xlu0 %201, %v197
    %v203 = vpop.permute.xlu0 %202
    %v204 = vlaneseq
    %v205 = vshrl.u32 %v204, 7
    %v206 = vadd.s32 %v205, 8
    %207 = vset.pattern.permute.xlu0 %v206
    %208 = vperm.xlu0 %207, %v197
    %v209 = vpop.permute.xlu0 %208
    %v210 = vperm.slane %v144, 5
    %v211 = vlaneseq
    %v212 = vshrl.u32 %v211, 7
    %214 = vset.pattern.permute.xlu0 %v212
    %215 = vperm.xlu0 %214, %v210
    %v216 = vpop.permute.xlu0 %215
    %v217 = vlaneseq
    %v218 = vshrl.u32 %v217, 7
    %v219 = vadd.s32 %v218, 8
    %220 = vset.pattern.permute.xlu0 %v219
    %221 = vperm.xlu0 %220, %v210
    %v222 = vpop.permute.xlu0 %221
    %v223 = vperm.slane %v144, 6
    %v224 = vlaneseq
    %v225 = vshrl.u32 %v224, 7
    %227 = vset.pattern.permute.xlu0 %v225
    %228 = vperm.xlu0 %227, %v223
    %v229 = vpop.permute.xlu0 %228
    %v230 = vlaneseq
    %v231 = vshrl.u32 %v230, 7
    %v232 = vadd.s32 %v231, 8
    %233 = vset.pattern.permute.xlu0 %v232
    %234 = vperm.xlu0 %233, %v223
    %v235 = vpop.permute.xlu0 %234
    %v236 = vperm.slane %v144, 7
    %v237 = vlaneseq
    %v238 = vshrl.u32 %v237, 7
    %240 = vset.pattern.permute.xlu0 %v238
    %241 = vperm.xlu0 %240, %v236
    %v242 = vpop.permute.xlu0 %241
    %v243 = vlaneseq
    %v244 = vshrl.u32 %v243, 7
    %v245 = vadd.s32 %v244, 8
    %246 = vset.pattern.permute.xlu0 %v245
    %247 = vperm.xlu0 %246, %v236
    %v248 = vpop.permute.xlu0 %247
    %v249 = vmul.f32 %v97, %v151
    %v250 = vmul.f32 %v98, %v157
    %v251 = vmul.f32 %v99, %v164
    %v252 = vmul.f32 %v100, %v170
    %v253 = vmul.f32 %v101, %v177
    %v254 = vmul.f32 %v102, %v183
    %v255 = vmul.f32 %v103, %v190
    %v256 = vmul.f32 %v104, %v196
    %v257 = vmul.f32 %v105, %v203
    %v258 = vmul.f32 %v106, %v209
    %v259 = vmul.f32 %v107, %v216
    %v260 = vmul.f32 %v108, %v222
    %v261 = vmul.f32 %v109, %v229
    %v262 = vmul.f32 %v110, %v235
    %v263 = vmul.f32 %v111, %v242
    %v264 = vmul.f32 %v112, %v248
    %vm265 = vcmask 261120
    %v266 = vsel %vm265, %v249, 0.0
    %v267 = vsel %vm265, %v250, 0.0
    %v268 = vadd.f32 %v266, %v267
    %v269 = vrot.slane %v268, 4
    %v270 = vadd.f32 %v268, %v269
    %v271 = vrot.slane %v270, 2
    %v272 = vadd.f32 %v270, %v271
    %v273 = vrot.slane %v272, 1
    %v274 = vadd.f32 %v272, %v273
    %v275 = vsel %vm265, %v251, 0.0
    %v276 = vsel %vm265, %v252, 0.0
    %v277 = vadd.f32 %v275, %v276
    %v278 = vrot.slane %v277, 4
    %v279 = vadd.f32 %v277, %v278
    %v280 = vrot.slane %v279, 2
    %v281 = vadd.f32 %v279, %v280
    %v282 = vrot.slane %v281, 1
    %v283 = vadd.f32 %v281, %v282
    %v284 = vsel %vm265, %v253, 0.0
    %v285 = vsel %vm265, %v254, 0.0
    %v286 = vadd.f32 %v284, %v285
    %v287 = vrot.slane %v286, 4
    %v288 = vadd.f32 %v286, %v287
    %v289 = vrot.slane %v288, 2
    %v290 = vadd.f32 %v288, %v289
    %v291 = vrot.slane %v290, 1
    %v292 = vadd.f32 %v290, %v291
    %v293 = vsel %vm265, %v255, 0.0
    %v294 = vsel %vm265, %v256, 0.0
    %v295 = vadd.f32 %v293, %v294
    %v296 = vrot.slane %v295, 4
    %v297 = vadd.f32 %v295, %v296
    %v298 = vrot.slane %v297, 2
    %v299 = vadd.f32 %v297, %v298
    %v300 = vrot.slane %v299, 1
    %v301 = vadd.f32 %v299, %v300
    %v302 = vsel %vm265, %v257, 0.0
    %v303 = vsel %vm265, %v258, 0.0
    %v304 = vadd.f32 %v302, %v303
    %v305 = vrot.slane %v304, 4
    %v306 = vadd.f32 %v304, %v305
    %v307 = vrot.slane %v306, 2
    %v308 = vadd.f32 %v306, %v307
    %v309 = vrot.slane %v308, 1
    %v310 = vadd.f32 %v308, %v309
    %v311 = vsel %vm265, %v259, 0.0
    %v312 = vsel %vm265, %v260, 0.0
    %v313 = vadd.f32 %v311, %v312
    %v314 = vrot.slane %v313, 4
    %v315 = vadd.f32 %v313, %v314
    %v316 = vrot.slane %v315, 2
    %v317 = vadd.f32 %v315, %v316
    %v318 = vrot.slane %v317, 1
    %v319 = vadd.f32 %v317, %v318
    %v320 = vsel %vm265, %v261, 0.0
    %v321 = vsel %vm265, %v262, 0.0
    %v322 = vadd.f32 %v320, %v321
    %v323 = vrot.slane %v322, 4
    %v324 = vadd.f32 %v322, %v323
    %v325 = vrot.slane %v324, 2
    %v326 = vadd.f32 %v324, %v325
    %v327 = vrot.slane %v326, 1
    %v328 = vadd.f32 %v326, %v327
    %v329 = vsel %vm265, %v263, 0.0
    %v330 = vsel %vm265, %v264, 0.0
    %v331 = vadd.f32 %v329, %v330
    %v332 = vrot.slane %v331, 4
    %v333 = vadd.f32 %v331, %v332
    %v334 = vrot.slane %v333, 2
    %v335 = vadd.f32 %v333, %v334
    %v336 = vrot.slane %v335, 1
    %v337 = vadd.f32 %v335, %v336
    %v338 = vpack.c.bf16 %v274, %v274
    %v339 = vpack.c.bf16 %v283, %v283
    %v340 = vpack.c.bf16 %v292, %v292
    %v341 = vpack.c.bf16 %v301, %v301
    %v342 = vpack.c.bf16 %v310, %v310
    %v343 = vpack.c.bf16 %v319, %v319
    %v344 = vpack.c.bf16 %v328, %v328
    %v345 = vpack.c.bf16 %v337, %v337
    %v346 = vld [vmem:[#allocation5] sm:$0xf]
    %v347 = vld [vmem:[#allocation5 + $0x4] sm:$0xf]
    %v348 = vld [vmem:[#allocation5 + $0x8] sm:$0xf]
    %v349 = vld [vmem:[#allocation5 + $0xc] sm:$0xf]
    %v350 = vld [vmem:[%s3] sm:$0x1]
    %v352 = vperm.slane %v350, 0
    %v362 = vunpack.c.l.b16 %v338
    %v363 = vunpack.c.l.b16 %v339
    %v364 = vunpack.c.l.b16 %v340
    %v365 = vunpack.c.l.b16 %v341
    %v366 = vunpack.c.l.b16 %v342
    %v367 = vunpack.c.l.b16 %v343
    %v368 = vunpack.c.l.b16 %v344
    %v369 = vunpack.c.l.b16 %v345
    %vm370 = vcmask 1041409
    %v371 = vsel %vm370, %v363, %v362
    %vm372 = vcmask 1042434
    %v373 = vsel %vm372, %v364, %v371
    %vm374 = vcmask 1043459
    %v375 = vsel %vm374, %v365, %v373
    %vm376 = vcmask 1044484
    %v377 = vsel %vm376, %v366, %v375
    %vm378 = vcmask 1045509
    %v379 = vsel %vm378, %v367, %v377
    %vm380 = vcmask 1046534
    %v381 = vsel %vm380, %v368, %v379
    %vm382 = vcmask 1047559
    %v383 = vsel %vm382, %v369, %v381
    %v384 = vpack.c.b16 %v383, %v383
    %v389 = vunpack.c.l.b16 %v346
    %v390 = vunpack.c.l.b16 %v347
    %v391 = vunpack.c.l.b16 %v348
    %v392 = vunpack.c.l.b16 %v349
    %v393 = vpack.c.b16 %v390, %v389
    %v394 = vpack.c.b16 %v392, %v391
    %v398 = vsel %vm265, %v384, 0
    %400 = vmatpush.bf16.msra.mxu0 0
    %401 = vmatpush.bf16.msra.mxu0 0
    %402 = vmatpush.bf16.msra.mxu0 0
    %403 = vmatpush.bf16.msra.mxu0 0
    %404 = vmatpush.bf16.msra.mxu0 0
    %405 = vmatpush.bf16.msra.mxu0 0
    %406 = vmatpush.bf16.msra.mxu0 %v394
    %407 = vmatpush.bf16.msra.mxu0 %v393
    %408 = vmatmul.bf16.gmra.mxu0 %v398
    %v409 = vpop.f32.mrf.mxu0
    %v410 = vadd.f32 %v352, %v409
    %v411 = vpop.f32.mrf.mxu0
    %412 = vdwg.mxu0
    %v413 = vmax.f32 %v410, 0.0
    %414 = vst [vmem:[#allocation11] sm:$0xff] %v413
    %v415 = vpack.c.bf16 %v413, %v413
    %v416 = vld [vmem:[#allocation7] sm:$0xf]
    %v417 = vld [vmem:[#allocation7 + $0x4] sm:$0xf]
    %v418 = vld [vmem:[#allocation7 + $0x8] sm:$0xf]
    %v419 = vld [vmem:[#allocation7 + $0xc] sm:$0xf]
    %v420 = vld [vmem:[#allocation7 + $0x10] sm:$0xf]
    %v421 = vld [vmem:[#allocation7 + $0x14] sm:$0xf]
    %v422 = vld [vmem:[#allocation7 + $0x18] sm:$0xf]
    %v423 = vld [vmem:[#allocation7 + $0x1c] sm:$0xf]
    %v424 = vld [vmem:[#allocation7 + $0x20] sm:$0xf]
    %v425 = vld [vmem:[#allocation7 + $0x24] sm:$0xf]
    %v426 = vld [vmem:[#allocation7 + $0x28] sm:$0xf]
    %v427 = vld [vmem:[#allocation7 + $0x2c] sm:$0xf]
    %v428 = vld [vmem:[#allocation7 + $0x30] sm:$0xf]
    %v429 = vld [vmem:[#allocation7 + $0x34] sm:$0xf]
    %v430 = vld [vmem:[#allocation7 + $0x38] sm:$0xf]
    %v431 = vld [vmem:[#allocation7 + $0x3c] sm:$0xf]
    %v432 = vld [vmem:[%s5] sm:$0x1]
    %v434 = vperm.slane %v432, 0
    %v452 = vunpack.c.l.b16 %v416
    %v453 = vunpack.c.l.b16 %v417
    %v454 = vunpack.c.l.b16 %v418
    %v455 = vunpack.c.l.b16 %v419
    %v456 = vunpack.c.l.b16 %v420
    %v457 = vunpack.c.l.b16 %v421
    %v458 = vunpack.c.l.b16 %v422
    %v459 = vunpack.c.l.b16 %v423
    %v460 = vunpack.c.l.b16 %v424
    %v461 = vunpack.c.l.b16 %v425
    %v462 = vunpack.c.l.b16 %v426
    %v463 = vunpack.c.l.b16 %v427
    %v464 = vunpack.c.l.b16 %v428
    %v465 = vunpack.c.l.b16 %v429
    %v466 = vunpack.c.l.b16 %v430
    %v467 = vunpack.c.l.b16 %v431
    %v468 = vpack.c.b16 %v453, %v452
    %v469 = vpack.c.b16 %v455, %v454
    %v470 = vpack.c.b16 %v457, %v456
    %v471 = vpack.c.b16 %v459, %v458
    %v472 = vpack.c.b16 %v461, %v460
    %v473 = vpack.c.b16 %v463, %v462
    %v474 = vpack.c.b16 %v465, %v464
    %v475 = vpack.c.b16 %v467, %v466
    %484 = vmatpush.bf16.msra.mxu0 %v475
    %485 = vmatpush.bf16.msra.mxu0 %v474
    %486 = vmatpush.bf16.msra.mxu0 %v473
    %487 = vmatpush.bf16.msra.mxu0 %v472
    %488 = vmatpush.bf16.msra.mxu0 %v471
    %489 = vmatpush.bf16.msra.mxu0 %v470
    %490 = vmatpush.bf16.msra.mxu0 %v469
    %491 = vmatpush.bf16.msra.mxu0 %v468
    %492 = vmatmul.bf16.gmra.mxu0 %v415
    %v493 = vpop.f32.mrf.mxu0
    %v494 = vadd.f32 %v434, %v493
    %v495 = vpop.f32.mrf.mxu0
    %496 = vdwg.mxu0
    %v497 = vmax.f32 %v494, 0.0
    %v498 = vpack.c.bf16 %v497, %v497
    %v499 = vld [vmem:[#allocation8] sm:$0xff]
    %v500 = vld [vmem:[#allocation8 + $0x8] sm:$0xff]
    %v501 = vld [vmem:[#allocation8 + $0x10] sm:$0xff]
    %v502 = vld [vmem:[#allocation8 + $0x18] sm:$0xf]
    %v503 = vld [vmem:[#allocation8 + $0x1c] sm:$0xff]
    %v504 = vld [vmem:[#allocation8 + $0x24] sm:$0xff]
    %v505 = vld [vmem:[#allocation8 + $0x2c] sm:$0xff]
    %v506 = vld [vmem:[#allocation8 + $0x34] sm:$0xf]
    %v507 = vld [vmem:[#allocation8 + $0x38] sm:$0xff]
    %v508 = vld [vmem:[#allocation8 + $0x40] sm:$0xff]
    %v509 = vld [vmem:[#allocation8 + $0x48] sm:$0xff]
    %v510 = vld [vmem:[#allocation8 + $0x50] sm:$0xf]
    %v511 = vld [vmem:[#allocation8 + $0x54] sm:$0xff]
    %v512 = vld [vmem:[#allocation8 + $0x5c] sm:$0xff]
    %v513 = vld [vmem:[#allocation8 + $0x64] sm:$0xff]
    %v514 = vld [vmem:[#allocation8 + $0x6c] sm:$0xf]
    %v515 = vld [vmem:[#allocation8 + $0x70] sm:$0xff]
    %v516 = vld [vmem:[#allocation8 + $0x78] sm:$0xff]
    %v517 = vld [vmem:[#allocation8 + $0x80] sm:$0xff]
    %v518 = vld [vmem:[#allocation8 + $0x88] sm:$0xf]
    %v519 = vld [vmem:[#allocation8 + $0x8c] sm:$0xff]
    %v520 = vld [vmem:[#allocation8 + $0x94] sm:$0xff]
    %v521 = vld [vmem:[#allocation8 + $0x9c] sm:$0xff]
    %v522 = vld [vmem:[#allocation8 + $0xa4] sm:$0xf]
    %v523 = vld [vmem:[#allocation8 + $0xa8] sm:$0xff]
    %v524 = vld [vmem:[#allocation8 + $0xb0] sm:$0xff]
    %v525 = vld [vmem:[#allocation8 + $0xb8] sm:$0xff]
    %v526 = vld [vmem:[#allocation8 + $0xc0] sm:$0xf]
    %v527 = vld [vmem:[#allocation8 + $0xc4] sm:$0xff]
    %v528 = vld [vmem:[#allocation8 + $0xcc] sm:$0xff]
    %v529 = vld [vmem:[#allocation8 + $0xd4] sm:$0xff]
    %v530 = vld [vmem:[#allocation8 + $0xdc] sm:$0xf]
    %v531 = vld [vmem:[#allocation8 + $0xe0] sm:$0xff]
    %v532 = vld [vmem:[#allocation8 + $0xe8] sm:$0xff]
    %v533 = vld [vmem:[#allocation8 + $0xf0] sm:$0xff]
    %v534 = vld [vmem:[#allocation8 + $0xf8] sm:$0xf]
    %v535 = vld [vmem:[#allocation8 + $0xfc] sm:$0xff]
    %v536 = vld [vmem:[#allocation8 + $0x104] sm:$0xff]
    %v537 = vld [vmem:[#allocation8 + $0x10c] sm:$0xff]
    %v538 = vld [vmem:[#allocation8 + $0x114] sm:$0xf]
    %v539 = vld [vmem:[#allocation8 + $0x118] sm:$0xff]
    %v540 = vld [vmem:[#allocation8 + $0x120] sm:$0xff]
    %v541 = vld [vmem:[#allocation8 + $0x128] sm:$0xff]
    %v542 = vld [vmem:[#allocation8 + $0x130] sm:$0xf]
    %v543 = vld [vmem:[#allocation8 + $0x134] sm:$0xff]
    %v544 = vld [vmem:[#allocation8 + $0x13c] sm:$0xff]
    %v545 = vld [vmem:[#allocation8 + $0x144] sm:$0xff]
    %v546 = vld [vmem:[#allocation8 + $0x14c] sm:$0xf]
    %v547 = vld [vmem:[#allocation8 + $0x150] sm:$0xff]
    %v548 = vld [vmem:[#allocation8 + $0x158] sm:$0xff]
    %v549 = vld [vmem:[#allocation8 + $0x160] sm:$0xff]
    %v550 = vld [vmem:[#allocation8 + $0x168] sm:$0xf]
    %v551 = vld [vmem:[#allocation8 + $0x16c] sm:$0xff]
    %v552 = vld [vmem:[#allocation8 + $0x174] sm:$0xff]
    %v553 = vld [vmem:[#allocation8 + $0x17c] sm:$0xff]
    %v554 = vld [vmem:[#allocation8 + $0x184] sm:$0xf]
    %v555 = vld [vmem:[#allocation8 + $0x188] sm:$0xff]
    %v556 = vld [vmem:[#allocation8 + $0x190] sm:$0xff]
    %v557 = vld [vmem:[#allocation8 + $0x198] sm:$0xff]
    %v558 = vld [vmem:[#allocation8 + $0x1a0] sm:$0xf]
    %v559 = vld [vmem:[#allocation8 + $0x1a4] sm:$0xff]
    %v560 = vld [vmem:[#allocation8 + $0x1ac] sm:$0xff]
    %v561 = vld [vmem:[#allocation8 + $0x1b4] sm:$0xff]
    %v562 = vld [vmem:[#allocation8 + $0x1bc] sm:$0xf]
    %v563 = vld [vmem:[%s7] sm:$0xff]
    %v565 = vperm.slane %v563, 0
    %v566 = vperm.slane %v563, 1
    %v567 = vperm.slane %v563, 2
    %v568 = vperm.slane %v563, 3
    %v569 = vperm.slane %v563, 4
    %v570 = vperm.slane %v563, 5
    %v571 = vperm.slane %v563, 6
    %v643 = vunpack.c.l.b16 %v499
    %v644 = vunpack.c.h.b16 %v499
    %v645 = vunpack.c.l.b16 %v500
    %v646 = vunpack.c.h.b16 %v500
    %v647 = vunpack.c.l.b16 %v501
    %v648 = vunpack.c.h.b16 %v501
    %v649 = vunpack.c.l.b16 %v502
    %v650 = vunpack.c.l.b16 %v503
    %v651 = vunpack.c.h.b16 %v503
    %v652 = vunpack.c.l.b16 %v504
    %v653 = vunpack.c.h.b16 %v504
    %v654 = vunpack.c.l.b16 %v505
    %v655 = vunpack.c.h.b16 %v505
    %v656 = vunpack.c.l.b16 %v506
    %v657 = vunpack.c.l.b16 %v507
    %v658 = vunpack.c.h.b16 %v507
    %v659 = vunpack.c.l.b16 %v508
    %v660 = vunpack.c.h.b16 %v508
    %v661 = vunpack.c.l.b16 %v509
    %v662 = vunpack.c.h.b16 %v509
    %v663 = vunpack.c.l.b16 %v510
    %v664 = vunpack.c.l.b16 %v511
    %v665 = vunpack.c.h.b16 %v511
    %v666 = vunpack.c.l.b16 %v512
    %v667 = vunpack.c.h.b16 %v512
    %v668 = vunpack.c.l.b16 %v513
    %v669 = vunpack.c.h.b16 %v513
    %v670 = vunpack.c.l.b16 %v514
    %v671 = vunpack.c.l.b16 %v515
    %v672 = vunpack.c.h.b16 %v515
    %v673 = vunpack.c.l.b16 %v516
    %v674 = vunpack.c.h.b16 %v516
    %v675 = vunpack.c.l.b16 %v517
    %v676 = vunpack.c.h.b16 %v517
    %v677 = vunpack.c.l.b16 %v518
    %v678 = vunpack.c.l.b16 %v519
    %v679 = vunpack.c.h.b16 %v519
    %v680 = vunpack.c.l.b16 %v520
    %v681 = vunpack.c.h.b16 %v520
    %v682 = vunpack.c.l.b16 %v521
    %v683 = vunpack.c.h.b16 %v521
    %v684 = vunpack.c.l.b16 %v522
    %v685 = vunpack.c.l.b16 %v523
    %v686 = vunpack.c.h.b16 %v523
    %v687 = vunpack.c.l.b16 %v524
    %v688 = vunpack.c.h.b16 %v524
    %v689 = vunpack.c.l.b16 %v525
    %v690 = vunpack.c.h.b16 %v525
    %v691 = vunpack.c.l.b16 %v526
    %v692 = vunpack.c.l.b16 %v527
    %v693 = vunpack.c.h.b16 %v527
    %v694 = vunpack.c.l.b16 %v528
    %v695 = vunpack.c.h.b16 %v528
    %v696 = vunpack.c.l.b16 %v529
    %v697 = vunpack.c.h.b16 %v529
    %v698 = vunpack.c.l.b16 %v530
    %v699 = vunpack.c.l.b16 %v531
    %v700 = vunpack.c.h.b16 %v531
    %v701 = vunpack.c.l.b16 %v532
    %v702 = vunpack.c.h.b16 %v532
    %v703 = vunpack.c.l.b16 %v533
    %v704 = vunpack.c.h.b16 %v533
    %v705 = vunpack.c.l.b16 %v534
    %v706 = vunpack.c.l.b16 %v535
    %v707 = vunpack.c.h.b16 %v535
    %v708 = vunpack.c.l.b16 %v536
    %v709 = vunpack.c.h.b16 %v536
    %v710 = vunpack.c.l.b16 %v537
    %v711 = vunpack.c.h.b16 %v537
    %v712 = vunpack.c.l.b16 %v538
    %v713 = vunpack.c.l.b16 %v539
    %v714 = vunpack.c.h.b16 %v539
    %v715 = vunpack.c.l.b16 %v540
    %v716 = vunpack.c.h.b16 %v540
    %v717 = vunpack.c.l.b16 %v541
    %v718 = vunpack.c.h.b16 %v541
    %v719 = vunpack.c.l.b16 %v542
    %v720 = vunpack.c.l.b16 %v543
    %v721 = vunpack.c.h.b16 %v543
    %v722 = vunpack.c.l.b16 %v544
    %v723 = vunpack.c.h.b16 %v544
    %v724 = vunpack.c.l.b16 %v545
    %v725 = vunpack.c.h.b16 %v545
    %v726 = vunpack.c.l.b16 %v546
    %v727 = vunpack.c.l.b16 %v547
    %v728 = vunpack.c.h.b16 %v547
    %v729 = vunpack.c.l.b16 %v548
    %v730 = vunpack.c.h.b16 %v548
    %v731 = vunpack.c.l.b16 %v549
    %v732 = vunpack.c.h.b16 %v549
    %v733 = vunpack.c.l.b16 %v550
    %v734 = vunpack.c.l.b16 %v551
    %v735 = vunpack.c.h.b16 %v551
    %v736 = vunpack.c.l.b16 %v552
    %v737 = vunpack.c.h.b16 %v552
    %v738 = vunpack.c.l.b16 %v553
    %v739 = vunpack.c.h.b16 %v553
    %v740 = vunpack.c.l.b16 %v554
    %v741 = vunpack.c.l.b16 %v555
    %v742 = vunpack.c.h.b16 %v555
    %v743 = vunpack.c.l.b16 %v556
    %v744 = vunpack.c.h.b16 %v556
    %v745 = vunpack.c.l.b16 %v557
    %v746 = vunpack.c.h.b16 %v557
    %v747 = vunpack.c.l.b16 %v558
    %v748 = vunpack.c.l.b16 %v559
    %v749 = vunpack.c.h.b16 %v559
    %v750 = vunpack.c.l.b16 %v560
    %v751 = vunpack.c.h.b16 %v560
    %v752 = vunpack.c.l.b16 %v561
    %v753 = vunpack.c.h.b16 %v561
    %v754 = vunpack.c.l.b16 %v562
    %v755 = vpack.c.b16 %v650, %v643
    %v756 = vpack.c.b16 %v651, %v644
    %v757 = vpack.c.b16 %v652, %v645
    %v758 = vpack.c.b16 %v653, %v646
    %v759 = vpack.c.b16 %v654, %v647
    %v760 = vpack.c.b16 %v655, %v648
    %v761 = vpack.c.b16 %v656, %v649
    %v762 = vpack.c.b16 %v664, %v657
    %v763 = vpack.c.b16 %v665, %v658
    %v764 = vpack.c.b16 %v666, %v659
    %v765 = vpack.c.b16 %v667, %v660
    %v766 = vpack.c.b16 %v668, %v661
    %v767 = vpack.c.b16 %v669, %v662
    %v768 = vpack.c.b16 %v670, %v663
    %v769 = vpack.c.b16 %v678, %v671
    %v770 = vpack.c.b16 %v679, %v672
    %v771 = vpack.c.b16 %v680, %v673
    %v772 = vpack.c.b16 %v681, %v674
    %v773 = vpack.c.b16 %v682, %v675
    %v774 = vpack.c.b16 %v683, %v676
    %v775 = vpack.c.b16 %v684, %v677
    %v776 = vpack.c.b16 %v692, %v685
    %v777 = vpack.c.b16 %v693, %v686
    %v778 = vpack.c.b16 %v694, %v687
    %v779 = vpack.c.b16 %v695, %v688
    %v780 = vpack.c.b16 %v696, %v689
    %v781 = vpack.c.b16 %v697, %v690
    %v782 = vpack.c.b16 %v698, %v691
    %v783 = vpack.c.b16 %v706, %v699
    %v784 = vpack.c.b16 %v707, %v700
    %v785 = vpack.c.b16 %v708, %v701
    %v786 = vpack.c.b16 %v709, %v702
    %v787 = vpack.c.b16 %v710, %v703
    %v788 = vpack.c.b16 %v711, %v704
    %v789 = vpack.c.b16 %v712, %v705
    %v790 = vpack.c.b16 %v720, %v713
    %v791 = vpack.c.b16 %v721, %v714
    %v792 = vpack.c.b16 %v722, %v715
    %v793 = vpack.c.b16 %v723, %v716
    %v794 = vpack.c.b16 %v724, %v717
    %v795 = vpack.c.b16 %v725, %v718
    %v796 = vpack.c.b16 %v726, %v719
    %v797 = vpack.c.b16 %v734, %v727
    %v798 = vpack.c.b16 %v735, %v728
    %v799 = vpack.c.b16 %v736, %v729
    %v800 = vpack.c.b16 %v737, %v730
    %v801 = vpack.c.b16 %v738, %v731
    %v802 = vpack.c.b16 %v739, %v732
    %v803 = vpack.c.b16 %v740, %v733
    %v804 = vpack.c.b16 %v748, %v741
    %v805 = vpack.c.b16 %v749, %v742
    %v806 = vpack.c.b16 %v750, %v743
    %v807 = vpack.c.b16 %v751, %v744
    %v808 = vpack.c.b16 %v752, %v745
    %v809 = vpack.c.b16 %v753, %v746
    %v810 = vpack.c.b16 %v754, %v747
    %867 = vmatpush.bf16.msra.mxu0 %v804
    %868 = vmatpush.bf16.msra.mxu0 %v797
    %869 = vmatpush.bf16.msra.mxu0 %v790
    %870 = vmatpush.bf16.msra.mxu0 %v783
    %871 = vmatpush.bf16.msra.mxu0 %v776
    %872 = vmatpush.bf16.msra.mxu0 %v769
    %873 = vmatpush.bf16.msra.mxu0 %v762
    %874 = vmatpush.bf16.msra.mxu0 %v755
    %875 = vmatmul.bf16.gmra.mxu0 %v498
    %v876 = vpop.f32.mrf.mxu0
    %v877 = vadd.f32 %v565, %v876
    %v878 = vpop.f32.mrf.mxu0
    %879 = vdwg.mxu0
    %880 = vmatpush.bf16.msra.mxu0 %v805
    %881 = vmatpush.bf16.msra.mxu0 %v798
    %882 = vmatpush.bf16.msra.mxu0 %v791
    %883 = vmatpush.bf16.msra.mxu0 %v784
    %884 = vmatpush.bf16.msra.mxu0 %v777
    %885 = vmatpush.bf16.msra.mxu0 %v770
    %886 = vmatpush.bf16.msra.mxu0 %v763
    %887 = vmatpush.bf16.msra.mxu0 %v756
    %888 = vmatmul.bf16.gmra.mxu0 %v498
    %v889 = vpop.f32.mrf.mxu0
    %v890 = vadd.f32 %v566, %v889
    %v891 = vpop.f32.mrf.mxu0
    %892 = vdwg.mxu0
    %893 = vmatpush.bf16.msra.mxu0 %v806
    %894 = vmatpush.bf16.msra.mxu0 %v799
    %895 = vmatpush.bf16.msra.mxu0 %v792
    %896 = vmatpush.bf16.msra.mxu0 %v785
    %897 = vmatpush.bf16.msra.mxu0 %v778
    %898 = vmatpush.bf16.msra.mxu0 %v771
    %899 = vmatpush.bf16.msra.mxu0 %v764
    %900 = vmatpush.bf16.msra.mxu0 %v757
    %901 = vmatmul.bf16.gmra.mxu0 %v498
    %v902 = vpop.f32.mrf.mxu0
    %v903 = vadd.f32 %v567, %v902
    %v904 = vpop.f32.mrf.mxu0
    %905 = vdwg.mxu0
    %906 = vmatpush.bf16.msra.mxu0 %v807
    %907 = vmatpush.bf16.msra.mxu0 %v800
    %908 = vmatpush.bf16.msra.mxu0 %v793
    %909 = vmatpush.bf16.msra.mxu0 %v786
    %910 = vmatpush.bf16.msra.mxu0 %v779
    %911 = vmatpush.bf16.msra.mxu0 %v772
    %912 = vmatpush.bf16.msra.mxu0 %v765
    %913 = vmatpush.bf16.msra.mxu0 %v758
    %914 = vmatmul.bf16.gmra.mxu0 %v498
    %v915 = vpop.f32.mrf.mxu0
    %v916 = vadd.f32 %v568, %v915
    %v917 = vpop.f32.mrf.mxu0
    %918 = vdwg.mxu0
    %919 = vmatpush.bf16.msra.mxu0 %v808
    %920 = vmatpush.bf16.msra.mxu0 %v801
    %921 = vmatpush.bf16.msra.mxu0 %v794
    %922 = vmatpush.bf16.msra.mxu0 %v787
    %923 = vmatpush.bf16.msra.mxu0 %v780
    %924 = vmatpush.bf16.msra.mxu0 %v773
    %925 = vmatpush.bf16.msra.mxu0 %v766
    %926 = vmatpush.bf16.msra.mxu0 %v759
    %927 = vmatmul.bf16.gmra.mxu0 %v498
    %v928 = vpop.f32.mrf.mxu0
    %v929 = vadd.f32 %v569, %v928
    %v930 = vpop.f32.mrf.mxu0
    %931 = vdwg.mxu0
    %932 = vmatpush.bf16.msra.mxu0 %v809
    %933 = vmatpush.bf16.msra.mxu0 %v802
    %934 = vmatpush.bf16.msra.mxu0 %v795
    %935 = vmatpush.bf16.msra.mxu0 %v788
    %936 = vmatpush.bf16.msra.mxu0 %v781
    %937 = vmatpush.bf16.msra.mxu0 %v774
    %938 = vmatpush.bf16.msra.mxu0 %v767
    %939 = vmatpush.bf16.msra.mxu0 %v760
    %940 = vmatmul.bf16.gmra.mxu0 %v498
    %v941 = vpop.f32.mrf.mxu0
    %v942 = vadd.f32 %v570, %v941
    %v943 = vpop.f32.mrf.mxu0
    %944 = vdwg.mxu0
    %945 = vmatpush.bf16.msra.mxu0 %v810
    %946 = vmatpush.bf16.msra.mxu0 %v803
    %947 = vmatpush.bf16.msra.mxu0 %v796
    %948 = vmatpush.bf16.msra.mxu0 %v789
    %949 = vmatpush.bf16.msra.mxu0 %v782
    %950 = vmatpush.bf16.msra.mxu0 %v775
    %951 = vmatpush.bf16.msra.mxu0 %v768
    %952 = vmatpush.bf16.msra.mxu0 %v761
    %953 = vmatmul.bf16.gmra.mxu0 %v498
    %v954 = vpop.f32.mrf.mxu0
    %v955 = vadd.f32 %v571, %v954
    %v956 = vpop.f32.mrf.mxu0
    %957 = vdwg.mxu0
    %v958 = vxor.u32 %v877, 2147483648
    %v959 = vxor.u32 %v890, 2147483648
    %v960 = vxor.u32 %v903, 2147483648
    %v961 = vxor.u32 %v916, 2147483648
    %v962 = vxor.u32 %v929, 2147483648
    %v963 = vxor.u32 %v942, 2147483648
    %v964 = vxor.u32 %v955, 2147483648
    %v965 = vmul.f32 %v958, 1.442695
    %v966 = vpow.pop %v965
    %v967 = vmul.f32 %v959, 1.442695
    %v968 = vpow.pop %v967
    %v969 = vmul.f32 %v960, 1.442695
    %v970 = vpow.pop %v969
    %v971 = vmul.f32 %v961, 1.442695
    %v972 = vpow.pop %v971
    %v973 = vmul.f32 %v962, 1.442695
    %v974 = vpow.pop %v973
    %v975 = vmul.f32 %v963, 1.442695
    %v976 = vpow.pop %v975
    %v977 = vmul.f32 %v964, 1.442695
    %v978 = vpow.pop %v977
    %v979 = vadd.f32 %v966, 1.0
    %v980 = vadd.f32 %v968, 1.0
    %v981 = vadd.f32 %v970, 1.0
    %v982 = vadd.f32 %v972, 1.0
    %v983 = vadd.f32 %v974, 1.0
    %v984 = vadd.f32 %v976, 1.0
    %v985 = vadd.f32 %v978, 1.0
    %v986 = vrcp.pop %v979
    %v987 = vmul.f32 %v979, %v986
    %v988 = vsub.f32 1.0, %v987
    %v989 = vmul.f32 %v986, %v988
    %v990 = vadd.f32 %v986, %v989
    %vm991 = vweird.f32 %v979
    %vm992 = vweird.f32 %v986
    %vm993 = vmor %vm991, %vm992
    %v994 = vsel %vm993, %v986, %v990
    %v995 = vand.u32 2147483647, %v979
    %vm996 = vcmp.eq.f32.partialorder %v995, 8.507059e+37
    %v997 = vand.u32 %v979, 2147483648
    %v998 = vor.u32 1.1754944e-38, %v997
    %v999 = vsel %vm996, %v998, %v994
    %v1000 = vmul.f32 1.0, %v999
    %v1001 = vrcp.pop %v980
    %v1002 = vmul.f32 %v980, %v1001
    %v1003 = vsub.f32 1.0, %v1002
    %v1004 = vmul.f32 %v1001, %v1003
    %v1005 = vadd.f32 %v1001, %v1004
    %vm1006 = vweird.f32 %v980
    %vm1007 = vweird.f32 %v1001
    %vm1008 = vmor %vm1006, %vm1007
    %v1009 = vsel %vm1008, %v1001, %v1005
    %v1010 = vand.u32 2147483647, %v980
    %vm1011 = vcmp.eq.f32.partialorder %v1010, 8.507059e+37
    %v1012 = vand.u32 %v980, 2147483648
    %v1013 = vor.u32 1.1754944e-38, %v1012
    %v1014 = vsel %vm1011, %v1013, %v1009
    %v1015 = vmul.f32 1.0, %v1014
    %v1016 = vrcp.pop %v981
    %v1017 = vmul.f32 %v981, %v1016
    %v1018 = vsub.f32 1.0, %v1017
    %v1019 = vmul.f32 %v1016, %v1018
    %v1020 = vadd.f32 %v1016, %v1019
    %vm1021 = vweird.f32 %v981
    %vm1022 = vweird.f32 %v1016
    %vm1023 = vmor %vm1021, %vm1022
    %v1024 = vsel %vm1023, %v1016, %v1020
    %v1025 = vand.u32 2147483647, %v981
    %vm1026 = vcmp.eq.f32.partialorder %v1025, 8.507059e+37
    %v1027 = vand.u32 %v981, 2147483648
    %v1028 = vor.u32 1.1754944e-38, %v1027
    %v1029 = vsel %vm1026, %v1028, %v1024
    %v1030 = vmul.f32 1.0, %v1029
    %v1031 = vrcp.pop %v982
    %v1032 = vmul.f32 %v982, %v1031
    %v1033 = vsub.f32 1.0, %v1032
    %v1034 = vmul.f32 %v1031, %v1033
    %v1035 = vadd.f32 %v1031, %v1034
    %vm1036 = vweird.f32 %v982
    %vm1037 = vweird.f32 %v1031
    %vm1038 = vmor %vm1036, %vm1037
    %v1039 = vsel %vm1038, %v1031, %v1035
    %v1040 = vand.u32 2147483647, %v982
    %vm1041 = vcmp.eq.f32.partialorder %v1040, 8.507059e+37
    %v1042 = vand.u32 %v982, 2147483648
    %v1043 = vor.u32 1.1754944e-38, %v1042
    %v1044 = vsel %vm1041, %v1043, %v1039
    %v1045 = vmul.f32 1.0, %v1044
    %v1046 = vrcp.pop %v983
    %v1047 = vmul.f32 %v983, %v1046
    %v1048 = vsub.f32 1.0, %v1047
    %v1049 = vmul.f32 %v1046, %v1048
    %v1050 = vadd.f32 %v1046, %v1049
    %vm1051 = vweird.f32 %v983
    %vm1052 = vweird.f32 %v1046
    %vm1053 = vmor %vm1051, %vm1052
    %v1054 = vsel %vm1053, %v1046, %v1050
    %v1055 = vand.u32 2147483647, %v983
    %vm1056 = vcmp.eq.f32.partialorder %v1055, 8.507059e+37
    %v1057 = vand.u32 %v983, 2147483648
    %v1058 = vor.u32 1.1754944e-38, %v1057
    %v1059 = vsel %vm1056, %v1058, %v1054
    %v1060 = vmul.f32 1.0, %v1059
    %v1061 = vrcp.pop %v984
    %v1062 = vmul.f32 %v984, %v1061
    %v1063 = vsub.f32 1.0, %v1062
    %v1064 = vmul.f32 %v1061, %v1063
    %v1065 = vadd.f32 %v1061, %v1064
    %vm1066 = vweird.f32 %v984
    %vm1067 = vweird.f32 %v1061
    %vm1068 = vmor %vm1066, %vm1067
    %v1069 = vsel %vm1068, %v1061, %v1065
    %v1070 = vand.u32 2147483647, %v984
    %vm1071 = vcmp.eq.f32.partialorder %v1070, 8.507059e+37
    %v1072 = vand.u32 %v984, 2147483648
    %v1073 = vor.u32 1.1754944e-38, %v1072
    %v1074 = vsel %vm1071, %v1073, %v1069
    %v1075 = vmul.f32 1.0, %v1074
    %v1076 = vrcp.pop %v985
    %v1077 = vmul.f32 %v985, %v1076
    %v1078 = vsub.f32 1.0, %v1077
    %v1079 = vmul.f32 %v1076, %v1078
    %v1080 = vadd.f32 %v1076, %v1079
    %vm1081 = vweird.f32 %v985
    %vm1082 = vweird.f32 %v1076
    %vm1083 = vmor %vm1081, %vm1082
    %v1084 = vsel %vm1083, %v1076, %v1080
    %v1085 = vand.u32 2147483647, %v985
    %vm1086 = vcmp.eq.f32.partialorder %v1085, 8.507059e+37
    %v1087 = vand.u32 %v985, 2147483648
    %v1088 = vor.u32 1.1754944e-38, %v1087
    %v1089 = vsel %vm1086, %v1088, %v1084
    %v1090 = vmul.f32 1.0, %v1089
    %1091 = vst [vmem:[#allocation10] sm:$0xff] %v1000
    %1092 = vst [vmem:[#allocation10 + $0x8] sm:$0xff] %v1015
    %1093 = vst [vmem:[#allocation10 + $0x10] sm:$0xff] %v1030
    %1094 = vst [vmem:[#allocation10 + $0x18] sm:$0xff] %v1045
    %1095 = vst [vmem:[#allocation10 + $0x20] sm:$0xff] %v1060
    %1096 = vst [vmem:[#allocation10 + $0x28] sm:$0xff] %v1075
    %1097 = vst [vmem:[#allocation10 + $0x30] sm:$0xff] %v1090
    // Predicated region
    $region50: #{simple_seq2seq_forward.1} parent=1 // pred_check
      _
    $region51: #{simple_seq2seq_forward.1} parent=1 // pred_check_branch
      %1099 = sbr.rel (0) target = $region53
    $region52: #{simple_seq2seq_forward.1} parent=1 // pred_region
      %1101 = vsyncadd [#allocation4], 0
      %s1103 = sshll.u32 [#allocation10], 4
      %s1104 = int_to_ptr.vmem [resolvable:$true] %s1103
      %s1105 = sshll.u32 %s8, 4
      %s1106 = int_to_ptr.hbm [resolvable:$true] %s1105
      %1108 = dma.vmem_to_hbm [thread:$0]  %s1104, 896, %s1106, [#allocation4]
    $region53: #{simple_seq2seq_forward.1} parent=1 // pred_fallthru
      _
    // Predicated region
    $region54: #{simple_seq2seq_forward.1} parent=1 // pred_check
      _
    $region55: #{simple_seq2seq_forward.1} parent=1 // pred_check_branch
      %1110 = sbr.rel (0) target = $region57
    $region56: #{simple_seq2seq_forward.1} parent=1 // pred_region
      %1112 = vsyncadd [#allocation12], 0
      %s1114 = sshll.u32 [#allocation11], 4
      %s1115 = int_to_ptr.vmem [resolvable:$true] %s1114
      %s1116 = sshll.u32 %s9, 4
      %s1117 = int_to_ptr.hbm [resolvable:$true] %s1116
      %1119 = dma.vmem_to_hbm [thread:$0]  %s1115, 128, %s1117, [#allocation12]
    $region57: #{simple_seq2seq_forward.1} parent=1 // pred_fallthru
      _
    // Predicated region
    $region58: #{simple_seq2seq_forward.1} parent=1 // pred_check
      _
    $region59: #{simple_seq2seq_forward.1} parent=1 // pred_check_branch
      %1121 = sbr.rel (0) target = $region61
    $region60: #{simple_seq2seq_forward.1} parent=1 // pred_region
      %1123 = dma.done [#allocation4], 896
    $region61: #{simple_seq2seq_forward.1} parent=1 // pred_fallthru
      _
    // Predicated region
    $region62: #{simple_seq2seq_forward.1} parent=1 // pred_check
      _
    $region63: #{simple_seq2seq_forward.1} parent=1 // pred_check_branch
      %1125 = sbr.rel (0) target = $region65
    $region64: #{simple_seq2seq_forward.1} parent=1 // pred_region
      %1127 = dma.done [#allocation12], 128
    $region65: #{simple_seq2seq_forward.1} parent=1 // pred_fallthru
      _
    %1128 = vsyncpa [#allocation3], 1
    %1129 = vsyncpa [#allocation6], 1
    %1130 = vsyncpa [#allocation9], 1
    %1131 = vsyncpa [#allocation4], 1
    %1132 = vsyncpa [#allocation12], 1

</llo_original>
